<compile_context>
chip_gen: v5e
topology: v5e:2x2
jax: 0.10.0
libtpu: 0.0.40
codegen_flags: <defaults>
</compile_context>

<pallas_src>
import functools

import jax
import jax.numpy as jnp
from jax.experimental import pallas as pl
from jax.experimental.pallas import tpu as pltpu

# ---- model hyper-params (small but consistent with the module's structure) ----
RGB_DIM = 256
OF_DIM = 256
REDUCED_DIM = 128
FC_DIM = 64
NUM_CLASSES = 7

BATCH = 32
LANE = 128  # TPU lane width


# -----------------------------------------------------------------------------
# Kernel: one fused GEMM  out_tile = x_tile @ W_total   (f32 accumulate on MXU)
# -----------------------------------------------------------------------------
def _fused_kernel(x_ref, w_ref, o_ref):
    o_ref[...] = jnp.dot(
        x_ref[...], w_ref[...], preferred_element_type=jnp.float32
    ).astype(o_ref.dtype)


# -----------------------------------------------------------------------------
# One-time weight preparation (model-load time, NOT per forward call)
# -----------------------------------------------------------------------------
def prepare_weights(w_rgb, w_of, w1, w2, wc, *, compute_dtype=jnp.bfloat16):
    """Fold all 5 bias-free Linear layers into a single [D, c_pad] matrix.

    Weights come in PyTorch Linear layout [out, in].
    Fold is done in f32, then cast once to the MXU compute dtype (bf16).
    """
    reduced = w_rgb.shape[0]
    num_classes = wc.shape[0]

    w_rgb = jnp.asarray(w_rgb, jnp.float32)
    w_of = jnp.asarray(w_of, jnp.float32)
    w1 = jnp.asarray(w1, jnp.float32)
    w2 = jnp.asarray(w2, jnp.float32)
    wc = jnp.asarray(wc, jnp.float32)

    w1_t = w1.T  # [2*reduced, fc_dim]
    # blockdiag(W_rgb^T, W_of^T) @ W_fc1^T  ==  vstack(Wrgb^T @ W1a^T, Wof^T @ W1b^T)
    w_fold = jnp.concatenate(
        [w_rgb.T @ w1_t[:reduced], w_of.T @ w1_t[reduced:]], axis=0
    )  # [rgb_dim + OF_dim, fc_dim]
    w_fold = (w_fold @ w2.T) @ wc.T  # [rgb_dim + OF_dim, num_classes]

    # Lane-dense output: pad class dim to a multiple of 128 (exactly 128 here).
    c_pad = ((num_classes + LANE - 1) // LANE) * LANE
    w_total = (
        jnp.zeros((w_fold.shape[0], c_pad), jnp.float32)
        .at[:, :num_classes]
        .set(w_fold)
    )
    return w_total.astype(compute_dtype), num_classes


def _pick_tb(batch, cap=1024):
    """Largest multiple-of-16 tile that divides B, preferring >= 2 grid steps
    (so dimension_semantics=('parallel',) can use both v7x TensorCores)."""
    if batch <= 16:
        return batch
    upper = min(cap, batch // 2)  # at least two grid steps when possible
    for tb in range(upper, 0, -1):
        if batch % tb == 0 and tb % 16 == 0:
            return tb
    for tb in range(min(cap, batch), 0, -1):
        if batch % tb == 0:
            return tb
    return batch


# -----------------------------------------------------------------------------
# Forward (hot path): a single pallas_call over the pre-folded weight
# -----------------------------------------------------------------------------
@functools.partial(jax.jit, static_argnames=("num_classes", "compute_dtype"))
def two_fc_forward(x, w_total, *, num_classes, compute_dtype=jnp.bfloat16):
    """x: [B, RGB_DIM + OF_DIM]; w_total: pre-folded [D, c_pad] (bf16)."""
    B, D = x.shape
    Dw, c_pad = w_total.shape
    assert D == Dw, (D, Dw)

    tb = _pick_tb(B)
    assert B % tb == 0, (B, tb)

    out_padded = pl.pallas_call(
        _fused_kernel,
        out_shape=jax.ShapeDtypeStruct((B, c_pad), x.dtype),
        grid_spec=pl.GridSpec(
            grid=(B // tb,),
            in_specs=[
                pl.BlockSpec((tb, D), lambda i: (i, 0)),       # x tile
                pl.BlockSpec((D, c_pad), lambda i: (0, 0)),    # folded weight (resident)
            ],
            out_specs=pl.BlockSpec((tb, c_pad), lambda i: (i, 0)),
        ),
        compiler_params=pltpu.CompilerParams(
            dimension_semantics=("parallel",)),
    )(x.astype(compute_dtype), w_total)

    return out_padded[:, :num_classes]


# -----------------------------------------------------------------------------
# Pure-JAX reference (exact PyTorch module math, f32)
# -----------------------------------------------------------------------------
def _reference(x, w_rgb, w_of, w1, w2, wc):
    h_rgb = x[:, :RGB_DIM] @ w_rgb.T
    h_of = x[:, RGB_DIM:RGB_DIM + OF_DIM] @ w_of.T
    temp = jnp.concatenate([h_rgb, h_of], axis=1)
    return ((temp @ w1.T) @ w2.T) @ wc.T


if __name__ == "__main__":
    key = jax.random.PRNGKey(0)
    kx, k1, k2, k3, k4, k5 = jax.random.split(key, 6)

    # deterministic synthetic parameters (PyTorch Linear layout: [out, in])
    x = jax.random.normal(kx, (BATCH, RGB_DIM + OF_DIM), dtype=jnp.float32)
    w_rgb = jax.random.normal(k1, (REDUCED_DIM, RGB_DIM), dtype=jnp.float32) * 0.02
    w_of = jax.random.normal(k2, (REDUCED_DIM, OF_DIM), dtype=jnp.float32) * 0.02
    w1 = jax.random.normal(k3, (FC_DIM, 2 * REDUCED_DIM), dtype=jnp.float32) * 0.02
    w2 = jax.random.normal(k4, (FC_DIM, FC_DIM), dtype=jnp.float32) * 0.02
    wc = jax.random.normal(k5, (NUM_CLASSES, FC_DIM), dtype=jnp.float32) * 0.02

    # one-time weight fold (model-load time)
    w_total, ncls = prepare_weights(w_rgb, w_of, w1, w2, wc)

    out = two_fc_forward(x, w_total, num_classes=ncls)
    out = jax.block_until_ready(out)

    ref = _reference(x, w_rgb, w_of, w1, w2, wc)
    assert out.shape == (BATCH, NUM_CLASSES), out.shape
    # bf16 operands + folded summation order -> relaxed tolerance vs f32 reference
    scale = jnp.max(jnp.abs(ref))
    max_err = jnp.max(jnp.abs(out.astype(jnp.float32) - ref))
    assert max_err <= 2e-2 * scale + 1e-5, (float(max_err), float(scale))

    print("KERNEL_OK")
</pallas_src>

<mosaic_0001>
module attributes {stable_mosaic.version = 11 : i64} {
  func.func @_fused_kernel(%arg0: i32, %arg1: memref<16x512xbf16, #tpu.memory_space<vmem>>, %arg2: memref<512x128xbf16, #tpu.memory_space<vmem>>, %arg3: memref<16x128xf32, #tpu.memory_space<vmem>>) attributes {dimension_semantics = [#tpu.dimension_semantics<parallel>], iteration_bounds = array<i64: 2>, scalar_prefetch = 0 : i64, scratch_operands = 0 : i64, tpu.core_type = #tpu.core_type<tc>, window_params = [{transform_indices = @transform_0, window_bounds = array<i64: 16, 512>}, {pipeline_mode = #tpu.pipeline_mode<synchronous>, transform_indices = @transform_1, window_bounds = array<i64: 512, 128>}, {transform_indices = @transform_2, window_bounds = array<i64: 16, 128>}]} {
    %c0 = arith.constant 0 : index
    %c0_0 = arith.constant 0 : index
    %0 = vector.load %arg1[%c0, %c0_0] : memref<16x512xbf16, #tpu.memory_space<vmem>>, vector<16x512xbf16>
    %c0_1 = arith.constant 0 : index
    %c0_2 = arith.constant 0 : index
    %1 = vector.load %arg2[%c0_1, %c0_2] : memref<512x128xbf16, #tpu.memory_space<vmem>>, vector<512x128xbf16>
    %cst = arith.constant dense<0.000000e+00> : vector<16x128xf32>
    %2 = tpu.matmul %0, %1, %cst {dimension_numbers = #tpu.dot_dimension_numbers<[1], [0], [0], [1], [0, 0, 1, 1], [], []>} : vector<16x512xbf16>, vector<512x128xbf16>, vector<16x128xf32> -> vector<16x128xf32>
    %c0_3 = arith.constant 0 : index
    %c0_4 = arith.constant 0 : index
    %3 = vector.load %arg3[%c0_3, %c0_4] : memref<16x128xf32, #tpu.memory_space<vmem>>, vector<16x128xf32>
    tpu.vector_store %arg3[%c0_3, %c0_4], %2 {strides = array<i32>} : memref<16x128xf32, #tpu.memory_space<vmem>>, vector<16x128xf32>,
    return
  }
  func.func @transform_0(%arg0: i32) -> (i32, i32) {
    %c0_i32 = arith.constant 0 : i32
    %c0_i32_0 = arith.constant 0 : i32
    return %arg0, %c0_i32 : i32, i32
  }
  func.func @transform_1(%arg0: i32) -> (i32, i32) {
    %c0_i32 = arith.constant 0 : i32
    %c0_i32_0 = arith.constant 0 : i32
    %c0_i32_1 = arith.constant 0 : i32
    return %c0_i32, %c0_i32_0 : i32, i32
  }
  func.func @transform_2(%arg0: i32) -> (i32, i32) {
    %c0_i32 = arith.constant 0 : i32
    %c0_i32_0 = arith.constant 0 : i32
    return %arg0, %c0_i32 : i32, i32
  }
}

</mosaic_0001>

<llo_original>
// kernel: two_fc_forward.1
$region0: #{two_fc_forward.1}
  #allocation0 [shape = 'u32[]', space=smem, size = 0x4, offset = 0x4, fixed_abs, tag = 'smem constant byte address 0x4 - core index']
  #allocation1 [shape = 'u32[72,128]{1,0:T(1,128)}', space=vmem, size = 0x9000, scoped, tag = 'internal scratch']
  %s0 = inlined_call_operand.vmem [shape: bf16[32,512], index: 0, kind: input, shape index: {}]
  %s1 = inlined_call_operand.hbm [shape: bf16[512,128], index: 1, kind: input, shape index: {}]
  %s2 = inlined_call_operand.vmem [shape: f32[32,128], index: 2, kind: output, shape index: {}]
  %s3 = sld [smem:[#allocation0]]
  $region45: #{two_fc_forward.1} parent=0
    _
  %s5 = ssub.s32 1, %s3
  %s6 = scalar_select 0, %s5, %s3
  $region1: #{two_fc_forward.1} parent=0
    #allocation2 [shape = 'u8[131072]{0}', space=vmem, size = 0x20000, scoped, tag = 'input window, operand 1, single buffered']
    #allocation3 [shape = 's32[2]{0}', space=sflag, size = 0x8, scoped, tag = 'scoped memory for two_fc_forward.1']
    %7 = vsyncpa [#allocation3], 0
    loop: start=0, step=1, limit=4
    $region2: #{two_fc_forward.1} parent=1 // loop_pre_header
      _
    $region3: #{two_fc_forward.1} parent=1 // loop_header
      %s9 = sphi 0, %s13
      %p10 = scmp.ge.s32.totalorder %s9, 4
      %s19 = sphi 0, %s21
      %s22 = sphi 0, %s19
      %s23 = sphi 0, %s22
      %s39 = sphi 0, %s23
      %s43 = sphi 0, %s43
      %s45 = sphi 0, %s43
      %s46 = sphi 0, %s45
      %s60 = sphi 0, %s46
      %s66 = sphi 0, %s68
      %s69 = sphi 0, %s66
      %s70 = sphi 0, %s69
      %s86 = sphi 0, %s70
    $region4: #{two_fc_forward.1} parent=1 // loop_header_branch
      %12 = sbr.rel (%p10) target = $region8
    $region5: #{two_fc_forward.1} parent=1 // loop_body
      %s14 = ssub.s32 %s9, 1
      %s15 = ssub.s32 %s9, 2
      %s16 = sadd.s32 %s9, 1
      %s17 = ssub.s32 %s9, %s16
      %p18 = scmp.eq.s32.totalorder %s17, 0
      %s20 = sadd.s32 %s19, 1
      %s21 = scalar_select %p18, %s19, %s20
      %p24 = pneg %p18
      %p25 = scmp.eq.s32.totalorder %s9, 1
      %p26 = por %p24, %p25
      %p27 = scmp.ne.s32.totalorder %s19, %s22
      %p28 = scmp.eq.s32.totalorder %s9, 0
      %p29 = por %p27, %p28
      %p30 = scmp.ne.s32.totalorder %s19, %s22
      %p31 = scmp.eq.s32.totalorder %s14, 1
      %p32 = por %p30, %p31
      %p33 = scmp.ne.s32.totalorder %s22, %s23
      %p34 = scmp.eq.s32.totalorder %s14, 0
      %p35 = por %p33, %p34
      %p36 = scmp.ne.s32.totalorder %s22, %s23
      %p37 = scmp.eq.s32.totalorder %s15, 1
      %p38 = por %p36, %p37
      %p40 = scmp.ne.s32.totalorder %s23, %s39
      %p41 = scmp.eq.s32.totalorder %s15, 0
      %p42 = por %p40, %p41
      %s44 = sadd.s32 %s43, 1
      %p47 = scmp.eq.s32.totalorder %s9, 1
      %p48 = scmp.ne.s32.totalorder %s43, %s45
      %p49 = scmp.eq.s32.totalorder %s9, 0
      %p50 = por %p48, %p49
      %p51 = scmp.ne.s32.totalorder %s43, %s45
      %p52 = scmp.eq.s32.totalorder %s14, 1
      %p53 = por %p51, %p52
      %p54 = scmp.ne.s32.totalorder %s45, %s46
      %p55 = scmp.eq.s32.totalorder %s14, 0
      %p56 = por %p54, %p55
      %p57 = scmp.ne.s32.totalorder %s45, %s46
      %p58 = scmp.eq.s32.totalorder %s15, 1
      %p59 = por %p57, %p58
      %p61 = scmp.ne.s32.totalorder %s46, %s60
      %p62 = scmp.eq.s32.totalorder %s15, 0
      %p63 = por %p61, %p62
      %s64 = ssub.s32 %s9, %s16
      %p65 = scmp.eq.s32.totalorder %s64, 0
      %s67 = sadd.s32 %s66, 1
      %s68 = scalar_select %p65, %s66, %s67
      %p71 = pneg %p65
      %p72 = scmp.eq.s32.totalorder %s9, 1
      %p73 = por %p71, %p72
      %p74 = scmp.ne.s32.totalorder %s66, %s69
      %p75 = scmp.eq.s32.totalorder %s9, 0
      %p76 = por %p74, %p75
      %p77 = scmp.ne.s32.totalorder %s66, %s69
      %p78 = scmp.eq.s32.totalorder %s14, 1
      %p79 = por %p77, %p78
      %p80 = scmp.ne.s32.totalorder %s69, %s70
      %p81 = scmp.eq.s32.totalorder %s14, 0
      %p82 = por %p80, %p81
      %p83 = scmp.ne.s32.totalorder %s69, %s70
      %p84 = scmp.eq.s32.totalorder %s15, 1
      %p85 = por %p83, %p84
      %p87 = scmp.ne.s32.totalorder %s70, %s86
      %p88 = scmp.eq.s32.totalorder %s15, 0
      %p89 = por %p87, %p88
      %p90 = scmp.le.s32.totalorder 1, %s9
      %p91 = scmp.lt.s32.totalorder %s9, 3
      %p92 = pnand %p90, %p91
      %p93 = pneg %p92
      // Predicated region
      $region9: #{two_fc_forward.1} parent=5 // pred_check
        _
      $region10: #{two_fc_forward.1} parent=5 // pred_check_branch
        %95 = sbr.rel (%p92) target = $region12
      $region11: #{two_fc_forward.1} parent=5 // pred_region
        %s96 = ssub.s32 %s9, 1
        // Predicated region
        $region13: #{two_fc_forward.1} parent=11 // pred_check
          %p97 = pneg %p56
        $region14: #{two_fc_forward.1} parent=11 // pred_check_branch
          %99 = sbr.rel (%p97) target = $region16
        $region15: #{two_fc_forward.1} parent=11 // pred_region
          %101 = vsyncadd [#allocation3], 0
          %s102 = sshll.u32 %s1, 4
          %s103 = int_to_ptr.hbm [resolvable:$true] %s102
          %s104 = sshll.u32 [#allocation2], 4
          %s105 = int_to_ptr.vmem [resolvable:$true] %s104
          %110 = dma.hbm_to_vmem [thread:$0]  %s103, 4096, %s105, [#allocation3], 64, 64, 4
        $region16: #{two_fc_forward.1} parent=11 // pred_fallthru
          _
      $region12: #{two_fc_forward.1} parent=5 // pred_fallthru
        _
      %p111 = scmp.lt.s32.totalorder %s9, 2
      // Predicated region
      $region17: #{two_fc_forward.1} parent=5 // pred_check
        %p112 = pneg %p111
      $region18: #{two_fc_forward.1} parent=5 // pred_check_branch
        %114 = sbr.rel (%p112) target = $region20
      $region19: #{two_fc_forward.1} parent=5 // pred_region
        // Predicated region
        $region21: #{two_fc_forward.1} parent=19 // pred_check
          %p115 = pneg %p29
        $region22: #{two_fc_forward.1} parent=19 // pred_check_branch
          %117 = sbr.rel (%p115) target = $region24
        $region23: #{two_fc_forward.1} parent=19 // pred_region
          %s118 = smul.u32 2, %s9
          %p119 = scmp.lt.s32.totalorder %s118, 3
          %s120 = scalar_select %p119, %s118, 3
          %s121 = smul.addr %s120, 4
          %s122 = smul.addr %s121, 4
          %s123 = scalar_lea.vmem %s0, %s122
          %s124 = smul.u32 2, %s9
        $region24: #{two_fc_forward.1} parent=19 // pred_fallthru
          _
      $region20: #{two_fc_forward.1} parent=5 // pred_fallthru
        _
      %p125 = scmp.le.s32.totalorder 1, %s9
      %p126 = scmp.lt.s32.totalorder %s9, 3
      %p127 = pnand %p125, %p126
      %p128 = pneg %p127
      // Predicated region
      $region25: #{two_fc_forward.1} parent=5 // pred_check
        _
      $region26: #{two_fc_forward.1} parent=5 // pred_check_branch
        %130 = sbr.rel (%p127) target = $region28
      $region27: #{two_fc_forward.1} parent=5 // pred_region
        %s131 = ssub.s32 %s9, 1
        // Predicated region
        $region29: #{two_fc_forward.1} parent=27 // pred_check
          %p132 = pneg %p56
        $region30: #{two_fc_forward.1} parent=27 // pred_check_branch
          %134 = sbr.rel (%p132) target = $region32
        $region31: #{two_fc_forward.1} parent=27 // pred_region
          %136 = dma.done [#allocation3], 4096
        $region32: #{two_fc_forward.1} parent=27 // pred_fallthru
          _
        %s137 = smul.u32 2, %s14
        %p138 = scmp.lt.s32.totalorder %s137, 3
        %s139 = scalar_select %p138, %s137, 3
        %s140 = smul.addr %s139, 4
        %s141 = smul.addr %s140, 4
        %s142 = scalar_lea.vmem %s0, %s141
        %p143 = pneg %p35
        %p144 = pneg %p32
        %p145 = pneg %p56
        %p146 = pneg %p53
        %p147 = pneg %p82
        %p148 = pneg %p79
        %s149 = smul.u32 2, %s14
        %p150 = scmp.lt.s32.totalorder %s149, 3
        %s151 = scalar_select %p150, %s149, 3
        %s152 = smul.addr %s151, 8
        %s153 = scalar_lea.vmem %s2, %s152
        %s154 = smul.u32 2, %s14
        %p155 = scmp.lt.s32.totalorder %s154, 3
        %s156 = scalar_select %p155, %s154, 3
        %s157 = smul.addr %s156, 4
        %s158 = smul.addr %s157, 4
        %s159 = scalar_lea.vmem %s0, %s158
        %s160 = smul.u32 2, %s14
        %s161 = smul.u32 2, %s14
        %p162 = scmp.lt.s32.totalorder %s161, 3
        %s163 = scalar_select %p162, %s161, 3
        %s164 = smul.addr %s163, 8
        %s165 = scalar_lea.vmem %s2, %s164
        %s166 = smul.u32 2, %s14
        %v167 = vld [vmem:[%s159] sm:$0xff]
        %v168 = vld [vmem:[%s159 + $0x8] sm:$0xff]
        %v169 = vld [vmem:[%s159 + $0x10] sm:$0xff]
        %v170 = vld [vmem:[%s159 + $0x18] sm:$0xff]
        %v171 = vld [vmem:[#allocation2] sm:$0xf]
        %v172 = vld [vmem:[#allocation2 + $0x4] sm:$0xf]
        %v173 = vld [vmem:[#allocation2 + $0x8] sm:$0xf]
        %v174 = vld [vmem:[#allocation2 + $0xc] sm:$0xf]
        %v175 = vld [vmem:[#allocation2 + $0x10] sm:$0xf]
        %v176 = vld [vmem:[#allocation2 + $0x14] sm:$0xf]
        %v177 = vld [vmem:[#allocation2 + $0x18] sm:$0xf]
        %v178 = vld [vmem:[#allocation2 + $0x1c] sm:$0xf]
        %v179 = vld [vmem:[#allocation2 + $0x20] sm:$0xf]
        %v180 = vld [vmem:[#allocation2 + $0x24] sm:$0xf]
        %v181 = vld [vmem:[#allocation2 + $0x28] sm:$0xf]
        %v182 = vld [vmem:[#allocation2 + $0x2c] sm:$0xf]
        %v183 = vld [vmem:[#allocation2 + $0x30] sm:$0xf]
        %v184 = vld [vmem:[#allocation2 + $0x34] sm:$0xf]
        %v185 = vld [vmem:[#allocation2 + $0x38] sm:$0xf]
        %v186 = vld [vmem:[#allocation2 + $0x3c] sm:$0xf]
        %v187 = vld [vmem:[#allocation2 + $0x40] sm:$0xf]
        %v188 = vld [vmem:[#allocation2 + $0x44] sm:$0xf]
        %v189 = vld [vmem:[#allocation2 + $0x48] sm:$0xf]
        %v190 = vld [vmem:[#allocation2 + $0x4c] sm:$0xf]
        %v191 = vld [vmem:[#allocation2 + $0x50] sm:$0xf]
        %v192 = vld [vmem:[#allocation2 + $0x54] sm:$0xf]
        %v193 = vld [vmem:[#allocation2 + $0x58] sm:$0xf]
        %v194 = vld [vmem:[#allocation2 + $0x5c] sm:$0xf]
        %v195 = vld [vmem:[#allocation2 + $0x60] sm:$0xf]
        %v196 = vld [vmem:[#allocation2 + $0x64] sm:$0xf]
        %v197 = vld [vmem:[#allocation2 + $0x68] sm:$0xf]
        %v198 = vld [vmem:[#allocation2 + $0x6c] sm:$0xf]
        %v199 = vld [vmem:[#allocation2 + $0x70] sm:$0xf]
        %v200 = vld [vmem:[#allocation2 + $0x74] sm:$0xf]
        %v201 = vld [vmem:[#allocation2 + $0x78] sm:$0xf]
        %v202 = vld [vmem:[#allocation2 + $0x7c] sm:$0xf]
        %v203 = vld [vmem:[#allocation2 + $0x80] sm:$0xf]
        %v204 = vld [vmem:[#allocation2 + $0x84] sm:$0xf]
        %v205 = vld [vmem:[#allocation2 + $0x88] sm:$0xf]
        %v206 = vld [vmem:[#allocation2 + $0x8c] sm:$0xf]
        %v207 = vld [vmem:[#allocation2 + $0x90] sm:$0xf]
        %v208 = vld [vmem:[#allocation2 + $0x94] sm:$0xf]
        %v209 = vld [vmem:[#allocation2 + $0x98] sm:$0xf]
        %v210 = vld [vmem:[#allocation2 + $0x9c] sm:$0xf]
        %v211 = vld [vmem:[#allocation2 + $0xa0] sm:$0xf]
        %v212 = vld [vmem:[#allocation2 + $0xa4] sm:$0xf]
        %v213 = vld [vmem:[#allocation2 + $0xa8] sm:$0xf]
        %v214 = vld [vmem:[#allocation2 + $0xac] sm:$0xf]
        %v215 = vld [vmem:[#allocation2 + $0xb0] sm:$0xf]
        %v216 = vld [vmem:[#allocation2 + $0xb4] sm:$0xf]
        %v217 = vld [vmem:[#allocation2 + $0xb8] sm:$0xf]
        %v218 = vld [vmem:[#allocation2 + $0xbc] sm:$0xf]
        %v219 = vld [vmem:[#allocation2 + $0xc0] sm:$0xf]
        %v220 = vld [vmem:[#allocation2 + $0xc4] sm:$0xf]
        %v221 = vld [vmem:[#allocation2 + $0xc8] sm:$0xf]
        %v222 = vld [vmem:[#allocation2 + $0xcc] sm:$0xf]
        %v223 = vld [vmem:[#allocation2 + $0xd0] sm:$0xf]
        %v224 = vld [vmem:[#allocation2 + $0xd4] sm:$0xf]
        %v225 = vld [vmem:[#allocation2 + $0xd8] sm:$0xf]
        %v226 = vld [vmem:[#allocation2 + $0xdc] sm:$0xf]
        %v227 = vld [vmem:[#allocation2 + $0xe0] sm:$0xf]
        %v228 = vld [vmem:[#allocation2 + $0xe4] sm:$0xf]
        %v229 = vld [vmem:[#allocation2 + $0xe8] sm:$0xf]
        %v230 = vld [vmem:[#allocation2 + $0xec] sm:$0xf]
        %v231 = vld [vmem:[#allocation2 + $0xf0] sm:$0xf]
        %v232 = vld [vmem:[#allocation2 + $0xf4] sm:$0xf]
        %v233 = vld [vmem:[#allocation2 + $0xf8] sm:$0xf]
        %v234 = vld [vmem:[#allocation2 + $0xfc] sm:$0xf]
        %v239 = vunpack.c.l.b16 %v167
        %v240 = vunpack.c.h.b16 %v167
        %v241 = vunpack.c.l.b16 %v168
        %v242 = vunpack.c.h.b16 %v168
        %v243 = vunpack.c.l.b16 %v169
        %v244 = vunpack.c.h.b16 %v169
        %v245 = vunpack.c.l.b16 %v170
        %v246 = vunpack.c.h.b16 %v170
        %v247 = vpack.c.b16 %v243, %v239
        %v248 = vpack.c.b16 %v244, %v240
        %v249 = vpack.c.b16 %v245, %v241
        %v250 = vpack.c.b16 %v246, %v242
        %v319 = vunpack.c.l.b16 %v171
        %v320 = vunpack.c.l.b16 %v172
        %v321 = vunpack.c.l.b16 %v173
        %v322 = vunpack.c.l.b16 %v174
        %v323 = vunpack.c.l.b16 %v175
        %v324 = vunpack.c.l.b16 %v176
        %v325 = vunpack.c.l.b16 %v177
        %v326 = vunpack.c.l.b16 %v178
        %v327 = vunpack.c.l.b16 %v179
        %v328 = vunpack.c.l.b16 %v180
        %v329 = vunpack.c.l.b16 %v181
        %v330 = vunpack.c.l.b16 %v182
        %v331 = vunpack.c.l.b16 %v183
        %v332 = vunpack.c.l.b16 %v184
        %v333 = vunpack.c.l.b16 %v185
        %v334 = vunpack.c.l.b16 %v186
        %v335 = vunpack.c.l.b16 %v187
        %v336 = vunpack.c.l.b16 %v188
        %v337 = vunpack.c.l.b16 %v189
        %v338 = vunpack.c.l.b16 %v190
        %v339 = vunpack.c.l.b16 %v191
        %v340 = vunpack.c.l.b16 %v192
        %v341 = vunpack.c.l.b16 %v193
        %v342 = vunpack.c.l.b16 %v194
        %v343 = vunpack.c.l.b16 %v195
        %v344 = vunpack.c.l.b16 %v196
        %v345 = vunpack.c.l.b16 %v197
        %v346 = vunpack.c.l.b16 %v198
        %v347 = vunpack.c.l.b16 %v199
        %v348 = vunpack.c.l.b16 %v200
        %v349 = vunpack.c.l.b16 %v201
        %v350 = vunpack.c.l.b16 %v202
        %v351 = vunpack.c.l.b16 %v203
        %v352 = vunpack.c.l.b16 %v204
        %v353 = vunpack.c.l.b16 %v205
        %v354 = vunpack.c.l.b16 %v206
        %v355 = vunpack.c.l.b16 %v207
        %v356 = vunpack.c.l.b16 %v208
        %v357 = vunpack.c.l.b16 %v209
        %v358 = vunpack.c.l.b16 %v210
        %v359 = vunpack.c.l.b16 %v211
        %v360 = vunpack.c.l.b16 %v212
        %v361 = vunpack.c.l.b16 %v213
        %v362 = vunpack.c.l.b16 %v214
        %v363 = vunpack.c.l.b16 %v215
        %v364 = vunpack.c.l.b16 %v216
        %v365 = vunpack.c.l.b16 %v217
        %v366 = vunpack.c.l.b16 %v218
        %v367 = vunpack.c.l.b16 %v219
        %v368 = vunpack.c.l.b16 %v220
        %v369 = vunpack.c.l.b16 %v221
        %v370 = vunpack.c.l.b16 %v222
        %v371 = vunpack.c.l.b16 %v223
        %v372 = vunpack.c.l.b16 %v224
        %v373 = vunpack.c.l.b16 %v225
        %v374 = vunpack.c.l.b16 %v226
        %v375 = vunpack.c.l.b16 %v227
        %v376 = vunpack.c.l.b16 %v228
        %v377 = vunpack.c.l.b16 %v229
        %v378 = vunpack.c.l.b16 %v230
        %v379 = vunpack.c.l.b16 %v231
        %v380 = vunpack.c.l.b16 %v232
        %v381 = vunpack.c.l.b16 %v233
        %v382 = vunpack.c.l.b16 %v234
        %v383 = vpack.c.b16 %v320, %v319
        %v384 = vpack.c.b16 %v322, %v321
        %v385 = vpack.c.b16 %v324, %v323
        %v386 = vpack.c.b16 %v326, %v325
        %v387 = vpack.c.b16 %v328, %v327
        %v388 = vpack.c.b16 %v330, %v329
        %v389 = vpack.c.b16 %v332, %v331
        %v390 = vpack.c.b16 %v334, %v333
        %v391 = vpack.c.b16 %v336, %v335
        %v392 = vpack.c.b16 %v338, %v337
        %v393 = vpack.c.b16 %v340, %v339
        %v394 = vpack.c.b16 %v342, %v341
        %v395 = vpack.c.b16 %v344, %v343
        %v396 = vpack.c.b16 %v346, %v345
        %v397 = vpack.c.b16 %v348, %v347
        %v398 = vpack.c.b16 %v350, %v349
        %v399 = vpack.c.b16 %v352, %v351
        %v400 = vpack.c.b16 %v354, %v353
        %v401 = vpack.c.b16 %v356, %v355
        %v402 = vpack.c.b16 %v358, %v357
        %v403 = vpack.c.b16 %v360, %v359
        %v404 = vpack.c.b16 %v362, %v361
        %v405 = vpack.c.b16 %v364, %v363
        %v406 = vpack.c.b16 %v366, %v365
        %v407 = vpack.c.b16 %v368, %v367
        %v408 = vpack.c.b16 %v370, %v369
        %v409 = vpack.c.b16 %v372, %v371
        %v410 = vpack.c.b16 %v374, %v373
        %v411 = vpack.c.b16 %v376, %v375
        %v412 = vpack.c.b16 %v378, %v377
        %v413 = vpack.c.b16 %v380, %v379
        %v414 = vpack.c.b16 %v382, %v381
        %447 = vmatpush.bf16.msra.mxu0 %v390
        %448 = vmatpush.bf16.msra.mxu0 %v389
        %449 = vmatpush.bf16.msra.mxu0 %v388
        %450 = vmatpush.bf16.msra.mxu0 %v387
        %451 = vmatpush.bf16.msra.mxu0 %v386
        %452 = vmatpush.bf16.msra.mxu0 %v385
        %453 = vmatpush.bf16.msra.mxu0 %v384
        %454 = vmatpush.bf16.msra.mxu0 %v383
        %455 = vmatmul.bf16.gmra.mxu0 %v247
        %v456 = vpop.f32.mrf.mxu0
        %v457 = vadd.f32 0.0, %v456
        %v458 = vpop.f32.mrf.mxu0
        %v459 = vadd.f32 0.0, %v458
        %460 = vdwg.mxu0
        %461 = vmatpush.bf16.msra.mxu0 %v398
        %462 = vmatpush.bf16.msra.mxu0 %v397
        %463 = vmatpush.bf16.msra.mxu0 %v396
        %464 = vmatpush.bf16.msra.mxu0 %v395
        %465 = vmatpush.bf16.msra.mxu0 %v394
        %466 = vmatpush.bf16.msra.mxu0 %v393
        %467 = vmatpush.bf16.msra.mxu0 %v392
        %468 = vmatpush.bf16.msra.mxu0 %v391
        %469 = vmatmul.bf16.gmra.mxu0 %v248
        %v470 = vpop.f32.mrf.mxu0
        %v471 = vadd.f32 %v457, %v470
        %v472 = vpop.f32.mrf.mxu0
        %v473 = vadd.f32 %v459, %v472
        %474 = vdwg.mxu0
        %475 = vmatpush.bf16.msra.mxu0 %v406
        %476 = vmatpush.bf16.msra.mxu0 %v405
        %477 = vmatpush.bf16.msra.mxu0 %v404
        %478 = vmatpush.bf16.msra.mxu0 %v403
        %479 = vmatpush.bf16.msra.mxu0 %v402
        %480 = vmatpush.bf16.msra.mxu0 %v401
        %481 = vmatpush.bf16.msra.mxu0 %v400
        %482 = vmatpush.bf16.msra.mxu0 %v399
        %483 = vmatmul.bf16.gmra.mxu0 %v249
        %v484 = vpop.f32.mrf.mxu0
        %v485 = vadd.f32 %v471, %v484
        %v486 = vpop.f32.mrf.mxu0
        %v487 = vadd.f32 %v473, %v486
        %488 = vdwg.mxu0
        %489 = vmatpush.bf16.msra.mxu0 %v414
        %490 = vmatpush.bf16.msra.mxu0 %v413
        %491 = vmatpush.bf16.msra.mxu0 %v412
        %492 = vmatpush.bf16.msra.mxu0 %v411
        %493 = vmatpush.bf16.msra.mxu0 %v410
        %494 = vmatpush.bf16.msra.mxu0 %v409
        %495 = vmatpush.bf16.msra.mxu0 %v408
        %496 = vmatpush.bf16.msra.mxu0 %v407
        %497 = vmatmul.bf16.gmra.mxu0 %v250
        %v498 = vpop.f32.mrf.mxu0
        %v499 = vadd.f32 %v485, %v498
        %v500 = vpop.f32.mrf.mxu0
        %v501 = vadd.f32 %v487, %v500
        %502 = vdwg.mxu0
        %503 = vst [vmem:[%s165] sm:$0xff] %v499
        %504 = vst [vmem:[%s165 + $0x8] sm:$0xff] %v501
        %s505 = smul.u32 2, %s14
        %p506 = scmp.lt.s32.totalorder %s505, 3
        %s507 = scalar_select %p506, %s505, 3
        %s508 = smul.addr %s507, 8
        %s509 = scalar_lea.vmem %s2, %s508
        // Predicated region
        $region33: #{two_fc_forward.1} parent=27 // pred_check
          %p510 = pneg %p79
        $region34: #{two_fc_forward.1} parent=27 // pred_check_branch
          %512 = sbr.rel (%p510) target = $region36
        $region35: #{two_fc_forward.1} parent=27 // pred_region
          %s513 = smul.u32 2, %s14
        $region36: #{two_fc_forward.1} parent=27 // pred_fallthru
          _
      $region28: #{two_fc_forward.1} parent=5 // pred_fallthru
        _
      %p514 = scmp.le.s32.totalorder 2, %s9
      // Predicated region
      $region37: #{two_fc_forward.1} parent=5 // pred_check
        %p515 = pneg %p514
      $region38: #{two_fc_forward.1} parent=5 // pred_check_branch
        %517 = sbr.rel (%p515) target = $region40
      $region39: #{two_fc_forward.1} parent=5 // pred_region
        %s518 = ssub.s32 %s9, 2
        // Predicated region
        $region41: #{two_fc_forward.1} parent=39 // pred_check
          %p519 = pneg %p85
        $region42: #{two_fc_forward.1} parent=39 // pred_check_branch
          %521 = sbr.rel (%p519) target = $region44
        $region43: #{two_fc_forward.1} parent=39 // pred_region
          %s522 = smul.u32 2, %s15
          %p523 = scmp.lt.s32.totalorder %s522, 3
          %s524 = scalar_select %p523, %s522, 3
          %s525 = smul.addr %s524, 8
          %s526 = scalar_lea.vmem %s2, %s525
        $region44: #{two_fc_forward.1} parent=39 // pred_fallthru
          _
      $region40: #{two_fc_forward.1} parent=5 // pred_fallthru
        _
    $region6: #{two_fc_forward.1} parent=1 // loop_footer
      %s13 = sadd.s32 1, %s9
    $region7: #{two_fc_forward.1} parent=1 // loop_footer_branch
      %8 = sbr.rel target = $region3
    $region8: #{two_fc_forward.1} parent=1 // loop_exit
      _
    %527 = vsyncpa [#allocation3], 1
    %s528 = scalar_lea.sflag [#allocation3], 1
    %529 = vsyncpa %s528, 1

</llo_original>
